<compile_context>
chip_gen: v7x
topology: tpu7x:2x2x1
jax: 0.10.0
libtpu: 0.0.40
codegen_flags: <defaults>
</compile_context>

<pallas_src>
import functools

import jax
import jax.numpy as jnp
from jax.experimental import pallas as pl
from jax.experimental.pallas import tpu as pltpu


LOG_STD_MIN = -20.0
LOG_STD_MAX = 2.0
HEAD_W = 128  # fused head width: mean in lanes [0:A], log_std in lanes [A:2A]


def actor_kernel(s_ref, w1_ref, b1_ref, w2_ref, b2_ref, wh_ref, bh_ref, out_ref):
    # fc1 + ReLU  (bf16 MXU operands, f32 accumulation, f32 bias/ReLU)
    x = s_ref[...].astype(jnp.bfloat16)
    h1 = jnp.dot(x, w1_ref[...], preferred_element_type=jnp.float32) + b1_ref[...]
    h1 = jnp.maximum(h1, 0.0).astype(jnp.bfloat16)

    # fc2 + ReLU
    h2 = jnp.dot(h1, w2_ref[...], preferred_element_type=jnp.float32) + b2_ref[...]
    h2 = jnp.maximum(h2, 0.0).astype(jnp.bfloat16)

    # fused mean / log_std head: one 128-wide matmul, one unmasked full-width store.
    # (log_std clamp is applied on the tiny sliced result in the wrapper.)
    out_ref[...] = (
        jnp.dot(h2, wh_ref[...], preferred_element_type=jnp.float32) + bh_ref[...]
    )


def _round_up(x, m):
    return (x + m - 1) // m * m


def _cdiv(a, b):
    return -(-a // b)


def _choose_batch_tile(batch, batch_tile):
    """16-row-aligned tile + padded batch with minimal waste; >=2 grid steps
    whenever there is at least two tiles' worth of work (v7x dual-TC)."""
    b16 = _round_up(max(batch, 1), 16)
    steps = _cdiv(b16, batch_tile)
    if steps < 2 and b16 >= 32:      # split across both TensorCores on v7x
        steps = 2
    tb = _round_up(_cdiv(b16, steps), 16)
    b_pad = _round_up(b16, tb)
    return tb, b_pad


def prepare_params(params):
    """One-time packing: bf16 weights, fused zero-padded 128-wide head. Call once, reuse."""
    hidden = params["w1"].shape[1]
    action_size = params["wm"].shape[1]
    assert 2 * action_size <= HEAD_W, (
        f"fused head requires 2*action_size <= {HEAD_W}, got action_size={action_size}")

    wh = jnp.zeros((hidden, HEAD_W), jnp.float32)
    wh = wh.at[:, :action_size].set(params["wm"])
    wh = wh.at[:, action_size:2 * action_size].set(params["ws"])
    bh = jnp.zeros((HEAD_W,), jnp.float32)
    bh = bh.at[:action_size].set(params["bm"])
    bh = bh.at[action_size:2 * action_size].set(params["bs"])

    return {
        "w1": params["w1"].astype(jnp.bfloat16),                 # (state_size, hidden)
        "b1": params["b1"].reshape(1, hidden).astype(jnp.float32),
        "w2": params["w2"].astype(jnp.bfloat16),                 # (hidden, hidden)
        "b2": params["b2"].reshape(1, hidden).astype(jnp.float32),
        "wh": wh.astype(jnp.bfloat16),                           # (hidden, 128) fused head
        "bh": bh.reshape(1, HEAD_W).astype(jnp.float32),
    }


@functools.partial(jax.jit, static_argnames=("action_size", "batch_tile"))
def actor_forward(state, prepared, *, action_size, batch_tile=1024):
    """state: (B, state_size) f32. Returns (mean, log_std), each (B, action_size) f32."""
    assert 2 * action_size <= HEAD_W
    B, state_size = state.shape
    hidden = prepared["w1"].shape[1]

    tb, b_pad = _choose_batch_tile(B, batch_tile)
    if b_pad != B:
        state = jnp.pad(state, ((0, b_pad - B), (0, 0)))
    grid = (b_pad // tb,)

    flops = 2 * b_pad * (state_size * hidden + hidden * hidden + hidden * HEAD_W)
    bytes_accessed = (
        b_pad * state_size * 4
        + sum(int(v.size) * v.dtype.itemsize for v in prepared.values())
        + b_pad * HEAD_W * 4
    )

    out = pl.pallas_call(
        actor_kernel,
        out_shape=jax.ShapeDtypeStruct((b_pad, HEAD_W), jnp.float32),
        grid=grid,
        in_specs=[
            pl.BlockSpec((tb, state_size), lambda i: (i, 0)),      # state tile
            pl.BlockSpec((state_size, hidden), lambda i: (0, 0)),  # w1 (VMEM-resident)
            pl.BlockSpec((1, hidden), lambda i: (0, 0)),           # b1
            pl.BlockSpec((hidden, hidden), lambda i: (0, 0)),      # w2 (VMEM-resident)
            pl.BlockSpec((1, hidden), lambda i: (0, 0)),           # b2
            pl.BlockSpec((hidden, HEAD_W), lambda i: (0, 0)),      # fused head weight
            pl.BlockSpec((1, HEAD_W), lambda i: (0, 0)),           # fused head bias
        ],
        out_specs=pl.BlockSpec((tb, HEAD_W), lambda i: (i, 0)),
        compiler_params=pltpu.CompilerParams(
            dimension_semantics=("parallel",)),
        cost_estimate=pl.CostEstimate(
            flops=flops, transcendentals=0, bytes_accessed=bytes_accessed),
    )(state, prepared["w1"], prepared["b1"], prepared["w2"], prepared["b2"],
      prepared["wh"], prepared["bh"])

    mean = out[:B, :action_size]
    log_std = jnp.clip(out[:B, action_size:2 * action_size], LOG_STD_MIN, LOG_STD_MAX)
    return mean, log_std


def init_actor_params(key, state_size, action_size, hidden_size=256):
    """Deterministic init mimicking PyTorch nn.Linear default (uniform +/- 1/sqrt(fan_in))."""
    def linear(k, fan_in, fan_out):
        kw, kb = jax.random.split(k)
        bound = 1.0 / jnp.sqrt(fan_in)
        w = jax.random.uniform(kw, (fan_in, fan_out), jnp.float32, -bound, bound)
        b = jax.random.uniform(kb, (fan_out,), jnp.float32, -bound, bound)
        return w, b

    k1, k2, k3, k4 = jax.random.split(key, 4)
    w1, b1 = linear(k1, state_size, hidden_size)
    w2, b2 = linear(k2, hidden_size, hidden_size)
    wm, bm = linear(k3, hidden_size, action_size)
    ws, bs = linear(k4, hidden_size, action_size)
    return {"w1": w1, "b1": b1, "w2": w2, "b2": b2,
            "wm": wm, "bm": bm, "ws": ws, "bs": bs}


def reference_forward(state, params):
    h1 = jnp.maximum(state @ params["w1"] + params["b1"], 0.0)
    h2 = jnp.maximum(h1 @ params["w2"] + params["b2"], 0.0)
    mean = h2 @ params["wm"] + params["bm"]
    log_std = jnp.clip(h2 @ params["ws"] + params["bs"], LOG_STD_MIN, LOG_STD_MAX)
    return mean, log_std


# TODO(synk): the `sample()` method (reparameterized Normal sampling + tanh squash
# + log-prob correction) is not part of forward(); it could be added using
# pltpu.prng_seed / pltpu.stateful_normal if needed.

if __name__ == "__main__":
    # Pendulum-v1: observation dim 3, action dim 1.
    STATE_SIZE = 3
    ACTION_SIZE = 1
    HIDDEN = 256
    BATCH = 8

    key = jax.random.PRNGKey(0)
    pkey, skey = jax.random.split(key)
    params = init_actor_params(pkey, STATE_SIZE, ACTION_SIZE, HIDDEN)

    # One-time packing (bf16 cast + head fusion + padding) outside the hot path.
    prepared = jax.tree_util.tree_map(jax.block_until_ready, prepare_params(params))

    state = jax.random.normal(skey, (BATCH, STATE_SIZE), jnp.float32)

    mean, log_std = actor_forward(state, prepared, action_size=ACTION_SIZE)
    jax.block_until_ready((mean, log_std))

    # correctness check against pure-JAX f32 reference (bf16 MXU inputs -> looser tol)
    mean_ref, log_std_ref = reference_forward(state, params)
    assert mean.shape == (BATCH, ACTION_SIZE)
    assert log_std.shape == (BATCH, ACTION_SIZE)
    assert jnp.allclose(mean, mean_ref, atol=3e-2, rtol=3e-2), "mean mismatch"
    assert jnp.allclose(log_std, log_std_ref, atol=3e-2, rtol=3e-2), "log_std mismatch"

    print("KERNEL_OK")
</pallas_src>

<mosaic_0001>
module attributes {stable_mosaic.version = 11 : i64} {
  func.func @actor_kernel(%arg0: i32, %arg1: memref<16x3xf32, #tpu.memory_space<vmem>>, %arg2: memref<3x256xbf16, #tpu.memory_space<vmem>>, %arg3: memref<1x256xf32, #tpu.memory_space<vmem>>, %arg4: memref<256x256xbf16, #tpu.memory_space<vmem>>, %arg5: memref<1x256xf32, #tpu.memory_space<vmem>>, %arg6: memref<256x128xbf16, #tpu.memory_space<vmem>>, %arg7: memref<1x128xf32, #tpu.memory_space<vmem>>, %arg8: memref<16x128xf32, #tpu.memory_space<vmem>>) attributes {dimension_semantics = [#tpu.dimension_semantics<parallel>], iteration_bounds = array<i64: 1>, scalar_prefetch = 0 : i64, scratch_operands = 0 : i64, tpu.core_type = #tpu.core_type<tc>, window_params = [{transform_indices = @transform_0, window_bounds = array<i64: 16, 3>}, {pipeline_mode = #tpu.pipeline_mode<synchronous>, transform_indices = @transform_1, window_bounds = array<i64: 3, 256>}, {pipeline_mode = #tpu.pipeline_mode<synchronous>, transform_indices = @transform_2, window_bounds = array<i64: 1, 256>}, {pipeline_mode = #tpu.pipeline_mode<synchronous>, transform_indices = @transform_3, window_bounds = array<i64: 256, 256>}, {pipeline_mode = #tpu.pipeline_mode<synchronous>, transform_indices = @transform_4, window_bounds = array<i64: 1, 256>}, {pipeline_mode = #tpu.pipeline_mode<synchronous>, transform_indices = @transform_5, window_bounds = array<i64: 256, 128>}, {pipeline_mode = #tpu.pipeline_mode<synchronous>, transform_indices = @transform_6, window_bounds = array<i64: 1, 128>}, {transform_indices = @transform_7, window_bounds = array<i64: 16, 128>}]} {
    %c0 = arith.constant 0 : index
    %c0_0 = arith.constant 0 : index
    %0 = vector.load %arg1[%c0, %c0_0] : memref<16x3xf32, #tpu.memory_space<vmem>>, vector<16x3xf32>
    %1 = arith.truncf %0 : vector<16x3xf32> to vector<16x3xbf16>
    %c0_1 = arith.constant 0 : index
    %c0_2 = arith.constant 0 : index
    %2 = vector.load %arg2[%c0_1, %c0_2] : memref<3x256xbf16, #tpu.memory_space<vmem>>, vector<3x256xbf16>
    %cst = arith.constant dense<0.000000e+00> : vector<16x256xf32>
    %3 = tpu.matmul %1, %2, %cst {dimension_numbers = #tpu.dot_dimension_numbers<[1], [0], [0], [1], [0, 0, 1, 1], [], []>} : vector<16x3xbf16>, vector<3x256xbf16>, vector<16x256xf32> -> vector<16x256xf32>
    %c0_3 = arith.constant 0 : index
    %c0_4 = arith.constant 0 : index
    %4 = vector.load %arg3[%c0_3, %c0_4] : memref<1x256xf32, #tpu.memory_space<vmem>>, vector<1x256xf32>
    %5 = vector.broadcast %4 : vector<1x256xf32> to vector<16x256xf32>
    %6 = arith.addf %3, %5 : vector<16x256xf32>
    %cst_5 = arith.constant 0.000000e+00 : f32
    %7 = vector.broadcast %cst_5 : f32 to vector<16x256xf32>
    %8 = arith.maximumf %6, %7 : vector<16x256xf32>
    %9 = arith.truncf %8 : vector<16x256xf32> to vector<16x256xbf16>
    %c0_6 = arith.constant 0 : index
    %c0_7 = arith.constant 0 : index
    %10 = vector.load %arg4[%c0_6, %c0_7] : memref<256x256xbf16, #tpu.memory_space<vmem>>, vector<256x256xbf16>
    %cst_8 = arith.constant dense<0.000000e+00> : vector<16x256xf32>
    %11 = tpu.matmul %9, %10, %cst_8 {dimension_numbers = #tpu.dot_dimension_numbers<[1], [0], [0], [1], [0, 0, 1, 1], [], []>} : vector<16x256xbf16>, vector<256x256xbf16>, vector<16x256xf32> -> vector<16x256xf32>
    %c0_9 = arith.constant 0 : index
    %c0_10 = arith.constant 0 : index
    %12 = vector.load %arg5[%c0_9, %c0_10] : memref<1x256xf32, #tpu.memory_space<vmem>>, vector<1x256xf32>
    %13 = vector.broadcast %12 : vector<1x256xf32> to vector<16x256xf32>
    %14 = arith.addf %11, %13 : vector<16x256xf32>
    %cst_11 = arith.constant 0.000000e+00 : f32
    %15 = vector.broadcast %cst_11 : f32 to vector<16x256xf32>
    %16 = arith.maximumf %14, %15 : vector<16x256xf32>
    %17 = arith.truncf %16 : vector<16x256xf32> to vector<16x256xbf16>
    %c0_12 = arith.constant 0 : index
    %c0_13 = arith.constant 0 : index
    %18 = vector.load %arg6[%c0_12, %c0_13] : memref<256x128xbf16, #tpu.memory_space<vmem>>, vector<256x128xbf16>
    %cst_14 = arith.constant dense<0.000000e+00> : vector<16x128xf32>
    %19 = tpu.matmul %17, %18, %cst_14 {dimension_numbers = #tpu.dot_dimension_numbers<[1], [0], [0], [1], [0, 0, 1, 1], [], []>} : vector<16x256xbf16>, vector<256x128xbf16>, vector<16x128xf32> -> vector<16x128xf32>
    %c0_15 = arith.constant 0 : index
    %c0_16 = arith.constant 0 : index
    %20 = vector.load %arg7[%c0_15, %c0_16] : memref<1x128xf32, #tpu.memory_space<vmem>>, vector<1x128xf32>
    %21 = vector.broadcast %20 : vector<1x128xf32> to vector<16x128xf32>
    %22 = arith.addf %19, %21 : vector<16x128xf32>
    %c0_17 = arith.constant 0 : index
    %c0_18 = arith.constant 0 : index
    %23 = vector.load %arg8[%c0_17, %c0_18] : memref<16x128xf32, #tpu.memory_space<vmem>>, vector<16x128xf32>
    tpu.vector_store %arg8[%c0_17, %c0_18], %22 {strides = array<i32>} : memref<16x128xf32, #tpu.memory_space<vmem>>, vector<16x128xf32>,
    return
  }
  func.func @transform_0(%arg0: i32) -> (i32, i32) {
    %c0_i32 = arith.constant 0 : i32
    %c0_i32_0 = arith.constant 0 : i32
    return %arg0, %c0_i32 : i32, i32
  }
  func.func @transform_1(%arg0: i32) -> (i32, i32) {
    %c0_i32 = arith.constant 0 : i32
    %c0_i32_0 = arith.constant 0 : i32
    %c0_i32_1 = arith.constant 0 : i32
    return %c0_i32, %c0_i32_0 : i32, i32
  }
  func.func @transform_2(%arg0: i32) -> (i32, i32) {
    %c0_i32 = arith.constant 0 : i32
    %c0_i32_0 = arith.constant 0 : i32
    %c0_i32_1 = arith.constant 0 : i32
    return %c0_i32, %c0_i32_0 : i32, i32
  }
  func.func @transform_3(%arg0: i32) -> (i32, i32) {
    %c0_i32 = arith.constant 0 : i32
    %c0_i32_0 = arith.constant 0 : i32
    %c0_i32_1 = arith.constant 0 : i32
    return %c0_i32, %c0_i32_0 : i32, i32
  }
  func.func @transform_4(%arg0: i32) -> (i32, i32) {
    %c0_i32 = arith.constant 0 : i32
    %c0_i32_0 = arith.constant 0 : i32
    %c0_i32_1 = arith.constant 0 : i32
    return %c0_i32, %c0_i32_0 : i32, i32
  }
  func.func @transform_5(%arg0: i32) -> (i32, i32) {
    %c0_i32 = arith.constant 0 : i32
    %c0_i32_0 = arith.constant 0 : i32
    %c0_i32_1 = arith.constant 0 : i32
    return %c0_i32, %c0_i32_0 : i32, i32
  }
  func.func @transform_6(%arg0: i32) -> (i32, i32) {
    %c0_i32 = arith.constant 0 : i32
    %c0_i32_0 = arith.constant 0 : i32
    %c0_i32_1 = arith.constant 0 : i32
    return %c0_i32, %c0_i32_0 : i32, i32
  }
  func.func @transform_7(%arg0: i32) -> (i32, i32) {
    %c0_i32 = arith.constant 0 : i32
    %c0_i32_0 = arith.constant 0 : i32
    return %arg0, %c0_i32 : i32, i32
  }
}

</mosaic_0001>

<llo_original>
// kernel: actor_forward.1
$region0: #{actor_forward.1}
  #allocation0 [shape = 'u32[]', space=smem, size = 0x4, offset = 0x4, fixed_abs, tag = 'smem constant byte address 0x4 - core index']
  #allocation1 [shape = 'u32[144,128]{1,0:T(1,128)}', space=vmem, size = 0x12000, scoped, tag = 'internal scratch']
  %s0 = inlined_call_operand.vmem [shape: f32[16,3], index: 0, kind: input, shape index: {}]
  %s1 = inlined_call_operand.vmem [shape: bf16[3,256], index: 1, kind: input, shape index: {}]
  %s2 = inlined_call_operand.vmem [shape: f32[1,256], index: 2, kind: input, shape index: {}]
  %s3 = inlined_call_operand.hbm [shape: bf16[256,256], index: 3, kind: input, shape index: {}]
  %s4 = inlined_call_operand.vmem [shape: f32[1,256], index: 4, kind: input, shape index: {}]
  %s5 = inlined_call_operand.hbm [shape: bf16[256,128], index: 5, kind: input, shape index: {}]
  %s6 = inlined_call_operand.vmem [shape: f32[1,128], index: 6, kind: input, shape index: {}]
  %s7 = inlined_call_operand.vmem [shape: f32[16,128], index: 7, kind: output, shape index: {}]
  %s8 = sld [smem:[#allocation0]]
  $region46: #{actor_forward.1} parent=0
    _
  %s10 = ssub.s32 1, %s8
  %s11 = scalar_select 0, %s10, %s8
  $region1: #{actor_forward.1} parent=0
    #allocation2 [shape = 'u8[131072]{0}', space=vmem, size = 0x20000, scoped, tag = 'input window, operand 3, single buffered']
    #allocation3 [shape = 's32[1]{0}', space=sflag, size = 0x4, scoped, tag = 'scoped memory for actor_forward.1']
    #allocation4 [shape = 'u8[65536]{0}', space=vmem, size = 0x10000, scoped, tag = 'input window, operand 5, single buffered']
    #allocation5 [shape = 's32[1]{0}', space=sflag, size = 0x4, scoped, tag = 'scoped memory for actor_forward.1']
    %12 = vsyncpa [#allocation3], 0
    %13 = vsyncpa [#allocation5], 0
    // Predicated region
    $region2: #{actor_forward.1} parent=1 // pred_check
      _
    $region3: #{actor_forward.1} parent=1 // pred_check_branch
      %15 = sbr.rel (0) target = $region5
    $region4: #{actor_forward.1} parent=1 // pred_region
      _
    $region5: #{actor_forward.1} parent=1 // pred_fallthru
      _
    // Predicated region
    $region6: #{actor_forward.1} parent=1 // pred_check
      _
    $region7: #{actor_forward.1} parent=1 // pred_check_branch
      %17 = sbr.rel (0) target = $region9
    $region8: #{actor_forward.1} parent=1 // pred_region
      _
    $region9: #{actor_forward.1} parent=1 // pred_fallthru
      _
    // Predicated region
    $region10: #{actor_forward.1} parent=1 // pred_check
      _
    $region11: #{actor_forward.1} parent=1 // pred_check_branch
      %19 = sbr.rel (0) target = $region13
    $region12: #{actor_forward.1} parent=1 // pred_region
      _
    $region13: #{actor_forward.1} parent=1 // pred_fallthru
      _
    // Predicated region
    $region14: #{actor_forward.1} parent=1 // pred_check
      _
    $region15: #{actor_forward.1} parent=1 // pred_check_branch
      %21 = sbr.rel (0) target = $region17
    $region16: #{actor_forward.1} parent=1 // pred_region
      %s23 = ssub.s32 4096, 4096
      %24 = vsyncadd [#allocation3], %s23
      %s25 = sshll.u32 [#allocation2], 4
      %s26 = int_to_ptr.vmem [resolvable:$true] %s25
      %31 = dma.hbm_to_vmem [thread:$0]  %s3, 4096, %s26, [#allocation3], 128, 128, 8
    $region17: #{actor_forward.1} parent=1 // pred_fallthru
      _
    // Predicated region
    $region18: #{actor_forward.1} parent=1 // pred_check
      _
    $region19: #{actor_forward.1} parent=1 // pred_check_branch
      %33 = sbr.rel (0) target = $region21
    $region20: #{actor_forward.1} parent=1 // pred_region
      _
    $region21: #{actor_forward.1} parent=1 // pred_fallthru
      _
    // Predicated region
    $region22: #{actor_forward.1} parent=1 // pred_check
      _
    $region23: #{actor_forward.1} parent=1 // pred_check_branch
      %35 = sbr.rel (0) target = $region25
    $region24: #{actor_forward.1} parent=1 // pred_region
      %s37 = ssub.s32 2048, 2048
      %38 = vsyncadd [#allocation5], %s37
      %s39 = sshll.u32 [#allocation4], 4
      %s40 = int_to_ptr.vmem [resolvable:$true] %s39
      %45 = dma.hbm_to_vmem [thread:$0]  %s5, 2048, %s40, [#allocation5], 64, 64, 4
    $region25: #{actor_forward.1} parent=1 // pred_fallthru
      _
    // Predicated region
    $region26: #{actor_forward.1} parent=1 // pred_check
      _
    $region27: #{actor_forward.1} parent=1 // pred_check_branch
      %47 = sbr.rel (0) target = $region29
    $region28: #{actor_forward.1} parent=1 // pred_region
      _
    $region29: #{actor_forward.1} parent=1 // pred_fallthru
      _
    // Predicated region
    $region30: #{actor_forward.1} parent=1 // pred_check
      _
    $region31: #{actor_forward.1} parent=1 // pred_check_branch
      %49 = sbr.rel (0) target = $region33
    $region32: #{actor_forward.1} parent=1 // pred_region
      %50 = dma.done [#allocation3], 4096
    $region33: #{actor_forward.1} parent=1 // pred_fallthru
      _
    // Predicated region
    $region34: #{actor_forward.1} parent=1 // pred_check
      _
    $region35: #{actor_forward.1} parent=1 // pred_check_branch
      %52 = sbr.rel (0) target = $region37
    $region36: #{actor_forward.1} parent=1 // pred_region
      %53 = dma.done [#allocation5], 2048
    $region37: #{actor_forward.1} parent=1 // pred_fallthru
      _
    %v55 = vld [vmem:[%s0] sm:$0xff]
    %v56 = vld [vmem:[%s0 + $0x8] sm:$0xff]
    %v57 = vpack.c.bf16 %v56, %v55
    %v58 = vld [vmem:[%s1] sm:$0xf]
    %v59 = vld [vmem:[%s2] sm:$0x3]
    %v61 = vlaneseq
    %v62 = vshrl.u32 %v61, 7
    %v63 = vsub.s32 0, %v62
    %v64 = vrot.slane %v59, %v63
    %v65 = vlaneseq
    %v66 = vshrl.u32 %v65, 7
    %v67 = vsub.s32 1, %v66
    %v68 = vrot.slane %v59, %v67
    %v73 = vunpack.c.l.s4 1983009808
    %v74 = vunpack.c.0.s8 %v73
    %v75 = vlaneseq
    %v76 = vshrl.u32 %v75, 7
    %v77 = vsub.s32 %v74, %v76
    %v78 = vrot.slane %v58, %v77
    %v79 = vcombine.high %v78, %v78
    %vm80 = vcmask 23552
    %v82 = vsel %vm80, %v57, 0
    %vm84 = vcmask 1040384
    %vm85 = vcmask 1041408
    %v86 = vsel %vm84, 4294967295, 65535
    %v87 = vsel %vm85, %v86, 0
    %v89 = vand.u32 %v78, %v87
    %v92 = vand.u32 %v79, %v87
    %94 = vmatprep.subr.bf16.mxu0 %v92
    %95 = vmatpush1.bf16.msra.mxu0 %v89
    %96 = vmatprep.subr.bf16.mxu0 0
    %97 = vmatpush1.bf16.msra.mxu0 0
    %98 = vmatprep.subr.bf16.mxu0 0
    %99 = vmatpush1.bf16.msra.mxu0 0
    %100 = vmatprep.subr.bf16.mxu0 0
    %101 = vmatpush1.bf16.msra.mxu0 0
    %102 = vmatprep.subr.bf16.mxu0 0
    %103 = vmatpush1.bf16.msra.mxu0 0
    %104 = vmatprep.subr.bf16.mxu0 0
    %105 = vmatpush1.bf16.msra.mxu0 0
    %106 = vmatprep.subr.bf16.mxu0 0
    %107 = vmatpush1.bf16.msra.mxu0 0
    %108 = vmatprep.subr.bf16.mxu0 0
    %109 = vmatpush1.bf16.msra.mxu0 0
    %110 = vmatprep.subr.bf16.mxu0 0
    %111 = vmatpush1.bf16.msra.mxu0 0
    %112 = vmatprep.subr.bf16.mxu0 0
    %113 = vmatpush1.bf16.msra.mxu0 0
    %114 = vmatprep.subr.bf16.mxu0 0
    %115 = vmatpush1.bf16.msra.mxu0 0
    %116 = vmatprep.subr.bf16.mxu0 0
    %117 = vmatpush1.bf16.msra.mxu0 0
    %118 = vmatprep.subr.bf16.mxu0 0
    %119 = vmatpush1.bf16.msra.mxu0 0
    %120 = vmatprep.subr.bf16.mxu0 0
    %121 = vmatpush1.bf16.msra.mxu0 0
    %122 = vmatprep.subr.bf16.mxu0 0
    %123 = vmatpush1.bf16.msra.mxu0 0
    %124 = vmatprep.subr.bf16.mxu0 0
    %125 = vmatpush1.bf16.msra.mxu0 0
    %126 = vmatprep.mubr.bf16.mxu0 0
    %127 = vmatmul.mubr.bf16.gmra.mrb[0].mxu0 %v82
    %v128 = vpop.f32.mrb[0].mxu0
    %v129 = vadd.f32 %v64, %v128
    %v130 = vpop.f32.mrb[0].mxu0
    %v131 = vadd.f32 %v68, %v130
    %v132 = vpop.f32.mrb[0].mxu0
    %v133 = vadd.f32 %v64, %v132
    %v134 = vpop.f32.mrb[0].mxu0
    %v135 = vadd.f32 %v68, %v134
    %136 = vdwg.mxu0
    %v137 = vmax.f32 %v129, 0.0
    %v138 = vmax.f32 %v131, 0.0
    %v139 = vmax.f32 %v133, 0.0
    %v140 = vmax.f32 %v135, 0.0
    %v141 = vpack.c.bf16 %v139, %v137
    %v142 = vpack.c.bf16 %v140, %v138
    %v143 = vld [vmem:[#allocation2] sm:$0xff]
    %v144 = vld [vmem:[#allocation2 + $0x8] sm:$0xff]
    %v145 = vld [vmem:[#allocation2 + $0x10] sm:$0xff]
    %v146 = vld [vmem:[#allocation2 + $0x18] sm:$0xff]
    %v147 = vld [vmem:[#allocation2 + $0x20] sm:$0xff]
    %v148 = vld [vmem:[#allocation2 + $0x28] sm:$0xff]
    %v149 = vld [vmem:[#allocation2 + $0x30] sm:$0xff]
    %v150 = vld [vmem:[#allocation2 + $0x38] sm:$0xff]
    %v151 = vld [vmem:[#allocation2 + $0x40] sm:$0xff]
    %v152 = vld [vmem:[#allocation2 + $0x48] sm:$0xff]
    %v153 = vld [vmem:[#allocation2 + $0x50] sm:$0xff]
    %v154 = vld [vmem:[#allocation2 + $0x58] sm:$0xff]
    %v155 = vld [vmem:[#allocation2 + $0x60] sm:$0xff]
    %v156 = vld [vmem:[#allocation2 + $0x68] sm:$0xff]
    %v157 = vld [vmem:[#allocation2 + $0x70] sm:$0xff]
    %v158 = vld [vmem:[#allocation2 + $0x78] sm:$0xff]
    %v159 = vld [vmem:[#allocation2 + $0x80] sm:$0xff]
    %v160 = vld [vmem:[#allocation2 + $0x88] sm:$0xff]
    %v161 = vld [vmem:[#allocation2 + $0x90] sm:$0xff]
    %v162 = vld [vmem:[#allocation2 + $0x98] sm:$0xff]
    %v163 = vld [vmem:[#allocation2 + $0xa0] sm:$0xff]
    %v164 = vld [vmem:[#allocation2 + $0xa8] sm:$0xff]
    %v165 = vld [vmem:[#allocation2 + $0xb0] sm:$0xff]
    %v166 = vld [vmem:[#allocation2 + $0xb8] sm:$0xff]
    %v167 = vld [vmem:[#allocation2 + $0xc0] sm:$0xff]
    %v168 = vld [vmem:[#allocation2 + $0xc8] sm:$0xff]
    %v169 = vld [vmem:[#allocation2 + $0xd0] sm:$0xff]
    %v170 = vld [vmem:[#allocation2 + $0xd8] sm:$0xff]
    %v171 = vld [vmem:[#allocation2 + $0xe0] sm:$0xff]
    %v172 = vld [vmem:[#allocation2 + $0xe8] sm:$0xff]
    %v173 = vld [vmem:[#allocation2 + $0xf0] sm:$0xff]
    %v174 = vld [vmem:[#allocation2 + $0xf8] sm:$0xff]
    %v175 = vld [vmem:[%s4] sm:$0x3]
    %v177 = vlaneseq
    %v178 = vshrl.u32 %v177, 7
    %v179 = vsub.s32 0, %v178
    %v180 = vrot.slane %v175, %v179
    %v181 = vlaneseq
    %v182 = vshrl.u32 %v181, 7
    %v183 = vsub.s32 1, %v182
    %v184 = vrot.slane %v175, %v183
    %v219 = vunpack.c.l.b16 %v143
    %v220 = vunpack.c.h.b16 %v143
    %v221 = vunpack.c.l.b16 %v144
    %v222 = vunpack.c.h.b16 %v144
    %v223 = vunpack.c.l.b16 %v145
    %v224 = vunpack.c.h.b16 %v145
    %v225 = vunpack.c.l.b16 %v146
    %v226 = vunpack.c.h.b16 %v146
    %v227 = vunpack.c.l.b16 %v147
    %v228 = vunpack.c.h.b16 %v147
    %v229 = vunpack.c.l.b16 %v148
    %v230 = vunpack.c.h.b16 %v148
    %v231 = vunpack.c.l.b16 %v149
    %v232 = vunpack.c.h.b16 %v149
    %v233 = vunpack.c.l.b16 %v150
    %v234 = vunpack.c.h.b16 %v150
    %v235 = vunpack.c.l.b16 %v151
    %v236 = vunpack.c.h.b16 %v151
    %v237 = vunpack.c.l.b16 %v152
    %v238 = vunpack.c.h.b16 %v152
    %v239 = vunpack.c.l.b16 %v153
    %v240 = vunpack.c.h.b16 %v153
    %v241 = vunpack.c.l.b16 %v154
    %v242 = vunpack.c.h.b16 %v154
    %v243 = vunpack.c.l.b16 %v155
    %v244 = vunpack.c.h.b16 %v155
    %v245 = vunpack.c.l.b16 %v156
    %v246 = vunpack.c.h.b16 %v156
    %v247 = vunpack.c.l.b16 %v157
    %v248 = vunpack.c.h.b16 %v157
    %v249 = vunpack.c.l.b16 %v158
    %v250 = vunpack.c.h.b16 %v158
    %v251 = vunpack.c.l.b16 %v159
    %v252 = vunpack.c.h.b16 %v159
    %v253 = vunpack.c.l.b16 %v160
    %v254 = vunpack.c.h.b16 %v160
    %v255 = vunpack.c.l.b16 %v161
    %v256 = vunpack.c.h.b16 %v161
    %v257 = vunpack.c.l.b16 %v162
    %v258 = vunpack.c.h.b16 %v162
    %v259 = vunpack.c.l.b16 %v163
    %v260 = vunpack.c.h.b16 %v163
    %v261 = vunpack.c.l.b16 %v164
    %v262 = vunpack.c.h.b16 %v164
    %v263 = vunpack.c.l.b16 %v165
    %v264 = vunpack.c.h.b16 %v165
    %v265 = vunpack.c.l.b16 %v166
    %v266 = vunpack.c.h.b16 %v166
    %v267 = vunpack.c.l.b16 %v167
    %v268 = vunpack.c.h.b16 %v167
    %v269 = vunpack.c.l.b16 %v168
    %v270 = vunpack.c.h.b16 %v168
    %v271 = vunpack.c.l.b16 %v169
    %v272 = vunpack.c.h.b16 %v169
    %v273 = vunpack.c.l.b16 %v170
    %v274 = vunpack.c.h.b16 %v170
    %v275 = vunpack.c.l.b16 %v171
    %v276 = vunpack.c.h.b16 %v171
    %v277 = vunpack.c.l.b16 %v172
    %v278 = vunpack.c.h.b16 %v172
    %v279 = vunpack.c.l.b16 %v173
    %v280 = vunpack.c.h.b16 %v173
    %v281 = vunpack.c.l.b16 %v174
    %v282 = vunpack.c.h.b16 %v174
    %v283 = vpack.c.b16 %v221, %v219
    %v284 = vpack.c.b16 %v222, %v220
    %v285 = vpack.c.b16 %v225, %v223
    %v286 = vpack.c.b16 %v226, %v224
    %v287 = vpack.c.b16 %v229, %v227
    %v288 = vpack.c.b16 %v230, %v228
    %v289 = vpack.c.b16 %v233, %v231
    %v290 = vpack.c.b16 %v234, %v232
    %v291 = vpack.c.b16 %v237, %v235
    %v292 = vpack.c.b16 %v238, %v236
    %v293 = vpack.c.b16 %v241, %v239
    %v294 = vpack.c.b16 %v242, %v240
    %v295 = vpack.c.b16 %v245, %v243
    %v296 = vpack.c.b16 %v246, %v244
    %v297 = vpack.c.b16 %v249, %v247
    %v298 = vpack.c.b16 %v250, %v248
    %v299 = vpack.c.b16 %v253, %v251
    %v300 = vpack.c.b16 %v254, %v252
    %v301 = vpack.c.b16 %v257, %v255
    %v302 = vpack.c.b16 %v258, %v256
    %v303 = vpack.c.b16 %v261, %v259
    %v304 = vpack.c.b16 %v262, %v260
    %v305 = vpack.c.b16 %v265, %v263
    %v306 = vpack.c.b16 %v266, %v264
    %v307 = vpack.c.b16 %v269, %v267
    %v308 = vpack.c.b16 %v270, %v268
    %v309 = vpack.c.b16 %v273, %v271
    %v310 = vpack.c.b16 %v274, %v272
    %v311 = vpack.c.b16 %v277, %v275
    %v312 = vpack.c.b16 %v278, %v276
    %v313 = vpack.c.b16 %v281, %v279
    %v314 = vpack.c.b16 %v282, %v280
    %347 = vmatprep.subr.bf16.mxu0 %v284
    %348 = vmatpush1.bf16.msra.mxu0 %v283
    %349 = vmatprep.subr.bf16.mxu0 %v286
    %350 = vmatpush1.bf16.msra.mxu0 %v285
    %351 = vmatprep.subr.bf16.mxu0 %v288
    %352 = vmatpush1.bf16.msra.mxu0 %v287
    %353 = vmatprep.subr.bf16.mxu0 %v290
    %354 = vmatpush1.bf16.msra.mxu0 %v289
    %355 = vmatprep.subr.bf16.mxu0 %v292
    %356 = vmatpush1.bf16.msra.mxu0 %v291
    %357 = vmatprep.subr.bf16.mxu0 %v294
    %358 = vmatpush1.bf16.msra.mxu0 %v293
    %359 = vmatprep.subr.bf16.mxu0 %v296
    %360 = vmatpush1.bf16.msra.mxu0 %v295
    %361 = vmatprep.subr.bf16.mxu0 %v298
    %362 = vmatpush1.bf16.msra.mxu0 %v297
    %363 = vmatprep.subr.bf16.mxu0 %v300
    %364 = vmatpush1.bf16.msra.mxu0 %v299
    %365 = vmatprep.subr.bf16.mxu0 %v302
    %366 = vmatpush1.bf16.msra.mxu0 %v301
    %367 = vmatprep.subr.bf16.mxu0 %v304
    %368 = vmatpush1.bf16.msra.mxu0 %v303
    %369 = vmatprep.subr.bf16.mxu0 %v306
    %370 = vmatpush1.bf16.msra.mxu0 %v305
    %371 = vmatprep.subr.bf16.mxu0 %v308
    %372 = vmatpush1.bf16.msra.mxu0 %v307
    %373 = vmatprep.subr.bf16.mxu0 %v310
    %374 = vmatpush1.bf16.msra.mxu0 %v309
    %375 = vmatprep.subr.bf16.mxu0 %v312
    %376 = vmatpush1.bf16.msra.mxu0 %v311
    %377 = vmatprep.subr.bf16.mxu0 %v314
    %378 = vmatpush1.bf16.msra.mxu0 %v313
    %379 = vmatprep.mubr.bf16.mxu0 %v142
    %380 = vmatmul.mubr.bf16.gmra.mrb[0].mxu0 %v141
    %v381 = vpop.f32.mrb[0].mxu0
    %v382 = vadd.f32 %v180, %v381
    %v383 = vpop.f32.mrb[0].mxu0
    %v384 = vadd.f32 %v184, %v383
    %v385 = vpop.f32.mrb[0].mxu0
    %v386 = vadd.f32 %v180, %v385
    %v387 = vpop.f32.mrb[0].mxu0
    %v388 = vadd.f32 %v184, %v387
    %389 = vdwg.mxu0
    %v390 = vmax.f32 %v382, 0.0
    %v391 = vmax.f32 %v384, 0.0
    %v392 = vmax.f32 %v386, 0.0
    %v393 = vmax.f32 %v388, 0.0
    %v394 = vpack.c.bf16 %v392, %v390
    %v395 = vpack.c.bf16 %v393, %v391
    %v396 = vld [vmem:[#allocation4] sm:$0xf]
    %v397 = vld [vmem:[#allocation4 + $0x4] sm:$0xf]
    %v398 = vld [vmem:[#allocation4 + $0x8] sm:$0xf]
    %v399 = vld [vmem:[#allocation4 + $0xc] sm:$0xf]
    %v400 = vld [vmem:[#allocation4 + $0x10] sm:$0xf]
    %v401 = vld [vmem:[#allocation4 + $0x14] sm:$0xf]
    %v402 = vld [vmem:[#allocation4 + $0x18] sm:$0xf]
    %v403 = vld [vmem:[#allocation4 + $0x1c] sm:$0xf]
    %v404 = vld [vmem:[#allocation4 + $0x20] sm:$0xf]
    %v405 = vld [vmem:[#allocation4 + $0x24] sm:$0xf]
    %v406 = vld [vmem:[#allocation4 + $0x28] sm:$0xf]
    %v407 = vld [vmem:[#allocation4 + $0x2c] sm:$0xf]
    %v408 = vld [vmem:[#allocation4 + $0x30] sm:$0xf]
    %v409 = vld [vmem:[#allocation4 + $0x34] sm:$0xf]
    %v410 = vld [vmem:[#allocation4 + $0x38] sm:$0xf]
    %v411 = vld [vmem:[#allocation4 + $0x3c] sm:$0xf]
    %v412 = vld [vmem:[#allocation4 + $0x40] sm:$0xf]
    %v413 = vld [vmem:[#allocation4 + $0x44] sm:$0xf]
    %v414 = vld [vmem:[#allocation4 + $0x48] sm:$0xf]
    %v415 = vld [vmem:[#allocation4 + $0x4c] sm:$0xf]
    %v416 = vld [vmem:[#allocation4 + $0x50] sm:$0xf]
    %v417 = vld [vmem:[#allocation4 + $0x54] sm:$0xf]
    %v418 = vld [vmem:[#allocation4 + $0x58] sm:$0xf]
    %v419 = vld [vmem:[#allocation4 + $0x5c] sm:$0xf]
    %v420 = vld [vmem:[#allocation4 + $0x60] sm:$0xf]
    %v421 = vld [vmem:[#allocation4 + $0x64] sm:$0xf]
    %v422 = vld [vmem:[#allocation4 + $0x68] sm:$0xf]
    %v423 = vld [vmem:[#allocation4 + $0x6c] sm:$0xf]
    %v424 = vld [vmem:[#allocation4 + $0x70] sm:$0xf]
    %v425 = vld [vmem:[#allocation4 + $0x74] sm:$0xf]
    %v426 = vld [vmem:[#allocation4 + $0x78] sm:$0xf]
    %v427 = vld [vmem:[#allocation4 + $0x7c] sm:$0xf]
    %v428 = vld [vmem:[%s6] sm:$0x1]
    %v430 = vlaneseq
    %v431 = vshrl.u32 %v430, 7
    %v432 = vsub.s32 0, %v431
    %v433 = vrot.slane %v428, %v432
    %v467 = vunpack.c.l.b16 %v396
    %v468 = vunpack.c.l.b16 %v397
    %v469 = vunpack.c.l.b16 %v398
    %v470 = vunpack.c.l.b16 %v399
    %v471 = vunpack.c.l.b16 %v400
    %v472 = vunpack.c.l.b16 %v401
    %v473 = vunpack.c.l.b16 %v402
    %v474 = vunpack.c.l.b16 %v403
    %v475 = vunpack.c.l.b16 %v404
    %v476 = vunpack.c.l.b16 %v405
    %v477 = vunpack.c.l.b16 %v406
    %v478 = vunpack.c.l.b16 %v407
    %v479 = vunpack.c.l.b16 %v408
    %v480 = vunpack.c.l.b16 %v409
    %v481 = vunpack.c.l.b16 %v410
    %v482 = vunpack.c.l.b16 %v411
    %v483 = vunpack.c.l.b16 %v412
    %v484 = vunpack.c.l.b16 %v413
    %v485 = vunpack.c.l.b16 %v414
    %v486 = vunpack.c.l.b16 %v415
    %v487 = vunpack.c.l.b16 %v416
    %v488 = vunpack.c.l.b16 %v417
    %v489 = vunpack.c.l.b16 %v418
    %v490 = vunpack.c.l.b16 %v419
    %v491 = vunpack.c.l.b16 %v420
    %v492 = vunpack.c.l.b16 %v421
    %v493 = vunpack.c.l.b16 %v422
    %v494 = vunpack.c.l.b16 %v423
    %v495 = vunpack.c.l.b16 %v424
    %v496 = vunpack.c.l.b16 %v425
    %v497 = vunpack.c.l.b16 %v426
    %v498 = vunpack.c.l.b16 %v427
    %v499 = vpack.c.b16 %v468, %v467
    %v500 = vpack.c.b16 %v470, %v469
    %v501 = vpack.c.b16 %v472, %v471
    %v502 = vpack.c.b16 %v474, %v473
    %v503 = vpack.c.b16 %v476, %v475
    %v504 = vpack.c.b16 %v478, %v477
    %v505 = vpack.c.b16 %v480, %v479
    %v506 = vpack.c.b16 %v482, %v481
    %v507 = vpack.c.b16 %v484, %v483
    %v508 = vpack.c.b16 %v486, %v485
    %v509 = vpack.c.b16 %v488, %v487
    %v510 = vpack.c.b16 %v490, %v489
    %v511 = vpack.c.b16 %v492, %v491
    %v512 = vpack.c.b16 %v494, %v493
    %v513 = vpack.c.b16 %v496, %v495
    %v514 = vpack.c.b16 %v498, %v497
    %531 = vmatprep.subr.bf16.mxu0 0
    %532 = vmatpush1.bf16.msra.mxu0 %v499
    %533 = vmatprep.subr.bf16.mxu0 0
    %534 = vmatpush1.bf16.msra.mxu0 %v500
    %535 = vmatprep.subr.bf16.mxu0 0
    %536 = vmatpush1.bf16.msra.mxu0 %v501
    %537 = vmatprep.subr.bf16.mxu0 0
    %538 = vmatpush1.bf16.msra.mxu0 %v502
    %539 = vmatprep.subr.bf16.mxu0 0
    %540 = vmatpush1.bf16.msra.mxu0 %v503
    %541 = vmatprep.subr.bf16.mxu0 0
    %542 = vmatpush1.bf16.msra.mxu0 %v504
    %543 = vmatprep.subr.bf16.mxu0 0
    %544 = vmatpush1.bf16.msra.mxu0 %v505
    %545 = vmatprep.subr.bf16.mxu0 0
    %546 = vmatpush1.bf16.msra.mxu0 %v506
    %547 = vmatprep.subr.bf16.mxu0 0
    %548 = vmatpush1.bf16.msra.mxu0 %v507
    %549 = vmatprep.subr.bf16.mxu0 0
    %550 = vmatpush1.bf16.msra.mxu0 %v508
    %551 = vmatprep.subr.bf16.mxu0 0
    %552 = vmatpush1.bf16.msra.mxu0 %v509
    %553 = vmatprep.subr.bf16.mxu0 0
    %554 = vmatpush1.bf16.msra.mxu0 %v510
    %555 = vmatprep.subr.bf16.mxu0 0
    %556 = vmatpush1.bf16.msra.mxu0 %v511
    %557 = vmatprep.subr.bf16.mxu0 0
    %558 = vmatpush1.bf16.msra.mxu0 %v512
    %559 = vmatprep.subr.bf16.mxu0 0
    %560 = vmatpush1.bf16.msra.mxu0 %v513
    %561 = vmatprep.subr.bf16.mxu0 0
    %562 = vmatpush1.bf16.msra.mxu0 %v514
    %563 = vmatprep.mubr.bf16.mxu0 %v395
    %564 = vmatmul.mubr.bf16.gmra.mrb[0].mxu0 %v394
    %v565 = vpop.f32.mrb[0].mxu0
    %v566 = vadd.f32 %v433, %v565
    %v567 = vpop.f32.mrb[0].mxu0
    %v568 = vpop.f32.mrb[0].mxu0
    %v569 = vadd.f32 %v433, %v568
    %v570 = vpop.f32.mrb[0].mxu0
    %571 = vdwg.mxu0
    %572 = vst [vmem:[%s7] sm:$0xff] %v566
    %573 = vst [vmem:[%s7 + $0x8] sm:$0xff] %v569
    // Predicated region
    $region38: #{actor_forward.1} parent=1 // pred_check
      _
    $region39: #{actor_forward.1} parent=1 // pred_check_branch
      %575 = sbr.rel (0) target = $region41
    $region40: #{actor_forward.1} parent=1 // pred_region
      _
    $region41: #{actor_forward.1} parent=1 // pred_fallthru
      _
    // Predicated region
    $region42: #{actor_forward.1} parent=1 // pred_check
      _
    $region43: #{actor_forward.1} parent=1 // pred_check_branch
      %577 = sbr.rel (0) target = $region45
    $region44: #{actor_forward.1} parent=1 // pred_region
      _
    $region45: #{actor_forward.1} parent=1 // pred_fallthru
      _
    %578 = vsyncpa [#allocation3], 1
    %579 = vsyncpa [#allocation5], 1

</llo_original>
